<compile_context>
chip_gen: v6e
topology: v6e:2x2x1
jax: 0.10.0
libtpu: 0.0.40
codegen_flags: <defaults>
</compile_context>

<pallas_src>
import functools

import jax
import jax.numpy as jnp
from jax import lax
from jax.experimental import pallas as pl
from jax.experimental.pallas import tpu as pltpu


def _round_up(x, m):
    return ((x + m - 1) // m) * m


def _critic_drr_kernel(state_ref, action_ref, w1s_ref, w1a_ref, vec_ref,
                       b2_ref, o_ref):
    # state: [TB, S]   action: [TB, A]
    # w1s:   [S, H]    w1a:    [A, H]
    # vec:   [4, H]    rows = (b1, gamma, beta, w2)
    # b2:    [1]  (SMEM scalar)
    # o:     [1, 1, TB]  (batch on the lane axis -> unmasked stores)

    # ---- Linear 1, split across the concat boundary (MXU, f32 accumulate) ----
    h = jnp.dot(state_ref[...], w1s_ref[...],
                preferred_element_type=jnp.float32)
    h = h + jnp.dot(action_ref[...], w1a_ref[...],
                    preferred_element_type=jnp.float32)

    vec = vec_ref[...].astype(jnp.float32)            # [4, H]
    b1, gamma, beta, w2 = vec[0:1], vec[1:2], vec[2:3], vec[3:4]  # each [1, H]

    h = h + b1

    # ---- LayerNorm over the last axis (biased var, eps = 1e-5) ----
    mean = jnp.mean(h, axis=-1, keepdims=True)
    centered = h - mean
    var = jnp.mean(centered * centered, axis=-1, keepdims=True)
    h_norm = centered * lax.rsqrt(var + 1e-5) * gamma + beta

    # ---- ReLU ----
    h_act = jnp.maximum(h_norm, 0.0)

    # ---- Linear 2 (H -> 1) as VPU multiply + lane reduction (no N=1 matmul) --
    q = jnp.sum(h_act * w2, axis=-1) + b2_ref[0]       # [TB]

    o_ref[...] = q[None, None, :].astype(o_ref.dtype)  # lane-dense [1, 1, TB]


def critic_drr_forward(state, action, params, *, block_b=1024,
                       matmul_dtype=None):
    """state: [B, S], action: [B, A]  ->  Q: [B, 1]"""
    B, S = state.shape
    A = action.shape[1]
    H = params["w1"].shape[1]

    # Batch tiling: largest of (block_b, B rounded to the 8-sublane quantum).
    TB = min(block_b, _round_up(B, 8))
    B_pad = _round_up(B, TB)
    num_blocks = B_pad // TB

    if B_pad != B:
        pad = ((0, B_pad - B), (0, 0))
        state = jnp.pad(state, pad)
        action = jnp.pad(action, pad)

    # Split w1 once so no [B, S+A] concat ever touches HBM.
    w1 = params["w1"]
    w1s = w1[:S, :]                                   # [S, H]
    w1a = w1[S:, :]                                   # [A, H]

    # Pack the small per-lane params into one VMEM tile: fewer tiny DMAs.
    vec = jnp.concatenate(
        [params["b1"], params["gamma"], params["beta"],
         params["w2"].reshape(1, H)], axis=0).astype(jnp.float32)  # [4, H]
    b2 = params["b2"].reshape((1,)).astype(jnp.float32)            # SMEM scalar

    if matmul_dtype is not None:
        # bf16 matmul inputs (v6e/v7x): halves HBM read bytes; accumulation
        # stays f32 via preferred_element_type, elementwise path stays f32.
        state = state.astype(matmul_dtype)
        action = action.astype(matmul_dtype)
        w1s = w1s.astype(matmul_dtype)
        w1a = w1a.astype(matmul_dtype)

    out = pl.pallas_call(
        _critic_drr_kernel,
        out_shape=jax.ShapeDtypeStruct((num_blocks, 1, TB), jnp.float32),
        grid_spec=pltpu.PrefetchScalarGridSpec(
            num_scalar_prefetch=0,
            grid=(num_blocks,),
            in_specs=[
                pl.BlockSpec((TB, S), lambda i: (i, 0)),      # state tile
                pl.BlockSpec((TB, A), lambda i: (i, 0)),      # action tile
                pl.BlockSpec((S, H), lambda i: (0, 0)),       # w1[:S]  (resident)
                pl.BlockSpec((A, H), lambda i: (0, 0)),       # w1[S:]  (resident)
                pl.BlockSpec((4, H), lambda i: (0, 0)),       # b1/gamma/beta/w2
                pl.BlockSpec(memory_space=pltpu.MemorySpace.SMEM),  # b2 scalar
            ],
            out_specs=pl.BlockSpec((1, 1, TB), lambda i: (i, 0, 0)),
        ),
        compiler_params=pltpu.CompilerParams(
            dimension_semantics=("parallel",)),   # megacore batch split (v7x)
    )(state, action, w1s, w1a, vec, b2)

    q = out.reshape(B_pad)[:B]
    return q[:, None]


def init_params(key, state_dim, action_dim, hidden_dim):
    """Deterministic init mirroring the module's __init__ (shapes only).

    nn.Linear weights use kaiming_uniform_ (fan_in, gain=sqrt(2)); biases use
    PyTorch's default uniform(-1/sqrt(fan_in), 1/sqrt(fan_in)); LayerNorm affine
    params start at gamma=1, beta=0. Weights stored as (in_features,
    out_features) so the kernel computes x @ W directly.
    """
    d_in = state_dim + action_dim
    k1, k2, k3, k4 = jax.random.split(key, 4)

    def kaiming_uniform(k, fan_in, shape):
        bound = jnp.sqrt(2.0) * jnp.sqrt(3.0 / fan_in)
        return jax.random.uniform(k, shape, jnp.float32, -bound, bound)

    def bias_uniform(k, fan_in, shape):
        bound = 1.0 / jnp.sqrt(fan_in)
        return jax.random.uniform(k, shape, jnp.float32, -bound, bound)

    return {
        "w1": kaiming_uniform(k1, d_in, (d_in, hidden_dim)),
        "b1": bias_uniform(k2, d_in, (1, hidden_dim)),
        "gamma": jnp.ones((1, hidden_dim), jnp.float32),
        "beta": jnp.zeros((1, hidden_dim), jnp.float32),
        "w2": kaiming_uniform(k3, hidden_dim, (hidden_dim, 1)),
        "b2": bias_uniform(k4, hidden_dim, (1, 1)),
    }


if __name__ == "__main__":
    B, STATE_DIM, ACTION_DIM, HIDDEN = 8, 24, 8, 32

    key = jax.random.PRNGKey(0)
    k_s, k_a, k_p = jax.random.split(key, 3)

    state = jax.random.normal(k_s, (B, STATE_DIM), jnp.float32)
    action = jax.random.normal(k_a, (B, ACTION_DIM), jnp.float32)
    params = init_params(k_p, STATE_DIM, ACTION_DIM, HIDDEN)

    fwd = jax.jit(functools.partial(critic_drr_forward, block_b=1024))
    q = fwd(state, action, params)
    jax.block_until_ready(q)

    # Pure-JAX reference (same math, concat done outside).
    x = jnp.concatenate([state, action], axis=1)
    h = x @ params["w1"] + params["b1"]
    mu = h.mean(-1, keepdims=True)
    var = ((h - mu) ** 2).mean(-1, keepdims=True)
    hn = (h - mu) * lax.rsqrt(var + 1e-5) * params["gamma"] + params["beta"]
    ref = jnp.maximum(hn, 0.0) @ params["w2"] + params["b2"]

    assert q.shape == (B, 1)
    assert jnp.allclose(q, ref, atol=1e-4, rtol=1e-4), (
        float(jnp.max(jnp.abs(q - ref))))
    print("KERNEL_OK")
</pallas_src>

<mosaic_0001>
module attributes {stable_mosaic.version = 11 : i64} {
  func.func @_critic_drr_kernel(%arg0: i32, %arg1: memref<8x24xf32, #tpu.memory_space<vmem>>, %arg2: memref<8x8xf32, #tpu.memory_space<vmem>>, %arg3: memref<24x32xf32, #tpu.memory_space<vmem>>, %arg4: memref<8x32xf32, #tpu.memory_space<vmem>>, %arg5: memref<4x32xf32, #tpu.memory_space<vmem>>, %arg6: memref<1xf32, #tpu.memory_space<smem>>, %arg7: memref<1x1x8xf32, #tpu.memory_space<vmem>>) attributes {dimension_semantics = [#tpu.dimension_semantics<parallel>], iteration_bounds = array<i64: 1>, scalar_prefetch = 0 : i64, scratch_operands = 0 : i64, tpu.core_type = #tpu.core_type<tc>, window_params = [{transform_indices = @transform_0, window_bounds = array<i64: 8, 24>}, {transform_indices = @transform_1, window_bounds = array<i64: 8, 8>}, {pipeline_mode = #tpu.pipeline_mode<synchronous>, transform_indices = @transform_2, window_bounds = array<i64: 24, 32>}, {pipeline_mode = #tpu.pipeline_mode<synchronous>, transform_indices = @transform_3, window_bounds = array<i64: 8, 32>}, {pipeline_mode = #tpu.pipeline_mode<synchronous>, transform_indices = @transform_4, window_bounds = array<i64: 4, 32>}, {transform_indices = @transform_5, window_bounds = array<i64: 1>}, {transform_indices = @transform_6, window_bounds = array<i64: 1, 1, 8>}]} {
    %c0 = arith.constant 0 : index
    %c0_0 = arith.constant 0 : index
    %0 = vector.load %arg1[%c0, %c0_0] : memref<8x24xf32, #tpu.memory_space<vmem>>, vector<8x24xf32>
    %c0_1 = arith.constant 0 : index
    %c0_2 = arith.constant 0 : index
    %1 = vector.load %arg3[%c0_1, %c0_2] : memref<24x32xf32, #tpu.memory_space<vmem>>, vector<24x32xf32>
    %cst = arith.constant dense<0.000000e+00> : vector<8x32xf32>
    %2 = tpu.matmul %0, %1, %cst {dimension_numbers = #tpu.dot_dimension_numbers<[1], [0], [0], [1], [0, 0, 1, 1], [], []>} : vector<8x24xf32>, vector<24x32xf32>, vector<8x32xf32> -> vector<8x32xf32>
    %c0_3 = arith.constant 0 : index
    %c0_4 = arith.constant 0 : index
    %3 = vector.load %arg2[%c0_3, %c0_4] : memref<8x8xf32, #tpu.memory_space<vmem>>, vector<8x8xf32>
    %c0_5 = arith.constant 0 : index
    %c0_6 = arith.constant 0 : index
    %4 = vector.load %arg4[%c0_5, %c0_6] : memref<8x32xf32, #tpu.memory_space<vmem>>, vector<8x32xf32>
    %cst_7 = arith.constant dense<0.000000e+00> : vector<8x32xf32>
    %5 = tpu.matmul %3, %4, %cst_7 {dimension_numbers = #tpu.dot_dimension_numbers<[1], [0], [0], [1], [0, 0, 1, 1], [], []>} : vector<8x8xf32>, vector<8x32xf32>, vector<8x32xf32> -> vector<8x32xf32>
    %6 = arith.addf %2, %5 : vector<8x32xf32>
    %c0_8 = arith.constant 0 : index
    %c0_9 = arith.constant 0 : index
    %7 = vector.load %arg5[%c0_8, %c0_9] : memref<4x32xf32, #tpu.memory_space<vmem>>, vector<4x32xf32>
    %8 = vector.extract_strided_slice %7 {offsets = [0, 0], sizes = [1, 32], strides = [1, 1]} : vector<4x32xf32> to vector<1x32xf32>
    %9 = vector.extract_strided_slice %7 {offsets = [1, 0], sizes = [1, 32], strides = [1, 1]} : vector<4x32xf32> to vector<1x32xf32>
    %10 = vector.extract_strided_slice %7 {offsets = [2, 0], sizes = [1, 32], strides = [1, 1]} : vector<4x32xf32> to vector<1x32xf32>
    %11 = vector.extract_strided_slice %7 {offsets = [3, 0], sizes = [1, 32], strides = [1, 1]} : vector<4x32xf32> to vector<1x32xf32>
    %12 = vector.broadcast %8 : vector<1x32xf32> to vector<8x32xf32>
    %13 = arith.addf %6, %12 : vector<8x32xf32>
    %cst_10 = arith.constant dense<0.000000e+00> : vector<8xf32>
    %14 = vector.multi_reduction <add>, %13, %cst_10 [1] : vector<8x32xf32> to vector<8xf32>
    %15 = vector.shape_cast %14 : vector<8xf32> to vector<8x1xf32>
    %cst_11 = arith.constant 3.200000e+01 : f32
    %16 = vector.broadcast %cst_11 : f32 to vector<8x1xf32>
    %17 = arith.divf %15, %16 : vector<8x1xf32>
    %18 = vector.broadcast %17 : vector<8x1xf32> to vector<8x32xf32>
    %19 = arith.subf %13, %18 : vector<8x32xf32>
    %20 = arith.mulf %19, %19 : vector<8x32xf32>
    %cst_12 = arith.constant dense<0.000000e+00> : vector<8xf32>
    %21 = vector.multi_reduction <add>, %20, %cst_12 [1] : vector<8x32xf32> to vector<8xf32>
    %22 = vector.shape_cast %21 : vector<8xf32> to vector<8x1xf32>
    %cst_13 = arith.constant 3.200000e+01 : f32
    %23 = vector.broadcast %cst_13 : f32 to vector<8x1xf32>
    %24 = arith.divf %22, %23 : vector<8x1xf32>
    %cst_14 = arith.constant 9.99999974E-6 : f32
    %25 = vector.broadcast %cst_14 : f32 to vector<8x1xf32>
    %26 = arith.addf %24, %25 : vector<8x1xf32>
    %27 = math.rsqrt %26 : vector<8x1xf32>
    %28 = vector.broadcast %27 : vector<8x1xf32> to vector<8x32xf32>
    %29 = arith.mulf %19, %28 : vector<8x32xf32>
    %30 = vector.broadcast %9 : vector<1x32xf32> to vector<8x32xf32>
    %31 = arith.mulf %29, %30 : vector<8x32xf32>
    %32 = vector.broadcast %10 : vector<1x32xf32> to vector<8x32xf32>
    %33 = arith.addf %31, %32 : vector<8x32xf32>
    %cst_15 = arith.constant 0.000000e+00 : f32
    %34 = vector.broadcast %cst_15 : f32 to vector<8x32xf32>
    %35 = arith.maximumf %33, %34 : vector<8x32xf32>
    %36 = vector.broadcast %11 : vector<1x32xf32> to vector<8x32xf32>
    %37 = arith.mulf %35, %36 : vector<8x32xf32>
    %cst_16 = arith.constant dense<0.000000e+00> : vector<8xf32>
    %38 = vector.multi_reduction <add>, %37, %cst_16 [1] : vector<8x32xf32> to vector<8xf32>
    %c0_17 = arith.constant 0 : index
    %39 = memref.load %arg6[%c0_17] : memref<1xf32, #tpu.memory_space<smem>>
    %40 = vector.broadcast %39 : f32 to vector<8xf32>
    %41 = arith.addf %38, %40 : vector<8xf32>
    %42 = vector.shape_cast %41 : vector<8xf32> to vector<1x1x8xf32>
    %c0_18 = arith.constant 0 : index
    %c0_19 = arith.constant 0 : index
    %c0_20 = arith.constant 0 : index
    %43 = vector.load %arg7[%c0_18, %c0_19, %c0_20] : memref<1x1x8xf32, #tpu.memory_space<vmem>>, vector<1x1x8xf32>
    tpu.vector_store %arg7[%c0_18, %c0_19, %c0_20], %42 {strides = array<i32>} : memref<1x1x8xf32, #tpu.memory_space<vmem>>, vector<1x1x8xf32>,
    return
  }
  func.func @transform_0(%arg0: i32) -> (i32, i32) {
    %c0_i32 = arith.constant 0 : i32
    %c0_i32_0 = arith.constant 0 : i32
    return %arg0, %c0_i32 : i32, i32
  }
  func.func @transform_1(%arg0: i32) -> (i32, i32) {
    %c0_i32 = arith.constant 0 : i32
    %c0_i32_0 = arith.constant 0 : i32
    return %arg0, %c0_i32 : i32, i32
  }
  func.func @transform_2(%arg0: i32) -> (i32, i32) {
    %c0_i32 = arith.constant 0 : i32
    %c0_i32_0 = arith.constant 0 : i32
    %c0_i32_1 = arith.constant 0 : i32
    return %c0_i32, %c0_i32_0 : i32, i32
  }
  func.func @transform_3(%arg0: i32) -> (i32, i32) {
    %c0_i32 = arith.constant 0 : i32
    %c0_i32_0 = arith.constant 0 : i32
    %c0_i32_1 = arith.constant 0 : i32
    return %c0_i32, %c0_i32_0 : i32, i32
  }
  func.func @transform_4(%arg0: i32) -> (i32, i32) {
    %c0_i32 = arith.constant 0 : i32
    %c0_i32_0 = arith.constant 0 : i32
    %c0_i32_1 = arith.constant 0 : i32
    return %c0_i32, %c0_i32_0 : i32, i32
  }
  func.func @transform_5(%arg0: i32) -> i32 {
    %c0_i32 = arith.constant 0 : i32
    %c0_i32_0 = arith.constant 0 : i32
    return %c0_i32 : i32
  }
  func.func @transform_6(%arg0: i32) -> (i32, i32, i32) {
    %c0_i32 = arith.constant 0 : i32
    %c0_i32_0 = arith.constant 0 : i32
    %c0_i32_1 = arith.constant 0 : i32
    return %arg0, %c0_i32, %c0_i32_0 : i32, i32, i32
  }
}

</mosaic_0001>

<llo_original>
// kernel: critic_drr_forward.1
$region0: #{critic_drr_forward.1}
  #allocation0 [shape = 'u32[]', space=smem, size = 0x4, offset = 0x4, fixed_abs, tag = 'smem constant byte address 0x4 - core index']
  #allocation1 [shape = 'u32[144,128]{1,0:T(1,128)}', space=vmem, size = 0x12000, scoped, tag = 'internal scratch']
  #allocation2 [shape = 'f32[1]{0:T(128)S(6)}', space=smem, size = 0x200, scoped, tag = 'scoped memory for critic_drr_forward.1']
  %s0 = inlined_call_operand.vmem [shape: f32[8,24], index: 0, kind: input, shape index: {}]
  %s1 = inlined_call_operand.vmem [shape: f32[8,8], index: 1, kind: input, shape index: {}]
  %s2 = inlined_call_operand.vmem [shape: f32[24,32], index: 2, kind: input, shape index: {}]
  %s3 = inlined_call_operand.vmem [shape: f32[8,32], index: 3, kind: input, shape index: {}]
  %s4 = inlined_call_operand.vmem [shape: f32[4,32], index: 4, kind: input, shape index: {}]
  %s5 = inlined_call_operand.<no memory space> [shape: f32[1], index: 5, kind: input, shape index: {}]
  %s6 = inlined_call_operand.hbm [shape: f32[1,1,8], index: 6, kind: output, shape index: {}]
  %s7 = sld [smem:[#allocation0]]
  $region34: #{critic_drr_forward.1} parent=0
    _
  %s9 = ssub.s32 1, %s7
  %s10 = scalar_select 0, %s9, %s7
  %11 = sst [smem:[#allocation2]] %s5
  $region1: #{critic_drr_forward.1} parent=0
    #allocation3 [shape = 'u8[512]{0}', space=vmem, size = 0x400, scoped, tag = 'output window, operand 0, single buffered']
    #allocation4 [shape = 's32[1]{0}', space=sflag, size = 0x4, scoped, tag = 'scoped memory for critic_drr_forward.1']
    %12 = vsyncpa [#allocation4], 0
    // Predicated region
    $region2: #{critic_drr_forward.1} parent=1 // pred_check
      _
    $region3: #{critic_drr_forward.1} parent=1 // pred_check_branch
      %14 = sbr.rel (0) target = $region5
    $region4: #{critic_drr_forward.1} parent=1 // pred_region
      _
    $region5: #{critic_drr_forward.1} parent=1 // pred_fallthru
      _
    // Predicated region
    $region6: #{critic_drr_forward.1} parent=1 // pred_check
      _
    $region7: #{critic_drr_forward.1} parent=1 // pred_check_branch
      %16 = sbr.rel (0) target = $region9
    $region8: #{critic_drr_forward.1} parent=1 // pred_region
      _
    $region9: #{critic_drr_forward.1} parent=1 // pred_fallthru
      _
    // Predicated region
    $region10: #{critic_drr_forward.1} parent=1 // pred_check
      _
    $region11: #{critic_drr_forward.1} parent=1 // pred_check_branch
      %18 = sbr.rel (0) target = $region13
    $region12: #{critic_drr_forward.1} parent=1 // pred_region
      _
    $region13: #{critic_drr_forward.1} parent=1 // pred_fallthru
      _
    // Predicated region
    $region14: #{critic_drr_forward.1} parent=1 // pred_check
      _
    $region15: #{critic_drr_forward.1} parent=1 // pred_check_branch
      %20 = sbr.rel (0) target = $region17
    $region16: #{critic_drr_forward.1} parent=1 // pred_region
      _
    $region17: #{critic_drr_forward.1} parent=1 // pred_fallthru
      _
    // Predicated region
    $region18: #{critic_drr_forward.1} parent=1 // pred_check
      _
    $region19: #{critic_drr_forward.1} parent=1 // pred_check_branch
      %22 = sbr.rel (0) target = $region21
    $region20: #{critic_drr_forward.1} parent=1 // pred_region
      _
    $region21: #{critic_drr_forward.1} parent=1 // pred_fallthru
      _
    // Predicated region
    $region22: #{critic_drr_forward.1} parent=1 // pred_check
      _
    $region23: #{critic_drr_forward.1} parent=1 // pred_check_branch
      %24 = sbr.rel (0) target = $region25
    $region24: #{critic_drr_forward.1} parent=1 // pred_region
      _
    $region25: #{critic_drr_forward.1} parent=1 // pred_fallthru
      _
    %v25 = vld [vmem:[%s0] sm:$0xff]
    %v26 = vld [vmem:[%s2] sm:$0xff]
    %v27 = vld [vmem:[%s2 + $0x8] sm:$0xff]
    %v28 = vld [vmem:[%s2 + $0x10] sm:$0xff]
    %v29 = vld [vmem:[%s1] sm:$0xff]
    %v30 = vld [vmem:[%s3] sm:$0xff]
    %vm31 = vcmask 64512
    %v33 = vsel %vm31, %v29, 0
    %35 = vmatprep.subr.mxu0 0.0
    %36 = vmatpush1.msra.mxu0 0.0
    %37 = vmatprep.subr.mxu0 0.0
    %38 = vmatpush1.msra.mxu0 0.0
    %39 = vmatprep.subr.mxu0 0.0
    %40 = vmatpush1.msra.mxu0 0.0
    %41 = vmatprep.subr.mxu0 0.0
    %42 = vmatpush1.msra.mxu0 0.0
    %43 = vmatprep.subr.mxu0 0.0
    %44 = vmatpush1.msra.mxu0 0.0
    %45 = vmatprep.subr.mxu0 0.0
    %46 = vmatpush1.msra.mxu0 0.0
    %47 = vmatprep.subr.mxu0 0.0
    %48 = vmatpush1.msra.mxu0 0.0
    %49 = vmatprep.subr.mxu0 0.0
    %50 = vmatpush1.msra.mxu0 0.0
    %51 = vmatprep.subr.mxu0 0.0
    %52 = vmatpush1.msra.mxu0 0.0
    %53 = vmatprep.subr.mxu0 0.0
    %54 = vmatpush1.msra.mxu0 0.0
    %55 = vmatprep.subr.mxu0 0.0
    %56 = vmatpush1.msra.mxu0 0.0
    %57 = vmatprep.subr.mxu0 0.0
    %58 = vmatpush1.msra.mxu0 0.0
    %59 = vmatprep.subr.mxu0 0.0
    %60 = vmatpush1.msra.mxu0 0.0
    %61 = vmatprep.subr.mxu0 0.0
    %62 = vmatpush1.msra.mxu0 0.0
    %63 = vmatprep.subr.mxu0 0.0
    %64 = vmatpush1.msra.mxu0 0.0
    %65 = vmatprep.subr.mxu0 0.0
    %66 = vmatpush1.msra.mxu0 %v30
    %67 = vmatprep.subr.mxu0 0.0
    %68 = vmatpush2.msra.mxu0 0.0
    %69 = vmatprep.subr.mxu0 0.0
    %70 = vmatpush2.msra.mxu0 0.0
    %71 = vmatprep.subr.mxu0 0.0
    %72 = vmatpush2.msra.mxu0 0.0
    %73 = vmatprep.subr.mxu0 0.0
    %74 = vmatpush2.msra.mxu0 0.0
    %75 = vmatprep.subr.mxu0 0.0
    %76 = vmatpush2.msra.mxu0 0.0
    %77 = vmatprep.subr.mxu0 0.0
    %78 = vmatpush2.msra.mxu0 0.0
    %79 = vmatprep.subr.mxu0 0.0
    %80 = vmatpush2.msra.mxu0 0.0
    %81 = vmatprep.subr.mxu0 0.0
    %82 = vmatpush2.msra.mxu0 0.0
    %83 = vmatprep.subr.mxu0 0.0
    %84 = vmatpush2.msra.mxu0 0.0
    %85 = vmatprep.subr.mxu0 0.0
    %86 = vmatpush2.msra.mxu0 0.0
    %87 = vmatprep.subr.mxu0 0.0
    %88 = vmatpush2.msra.mxu0 0.0
    %89 = vmatprep.subr.mxu0 0.0
    %90 = vmatpush2.msra.mxu0 0.0
    %91 = vmatprep.subr.mxu0 0.0
    %92 = vmatpush2.msra.mxu0 0.0
    %93 = vmatprep.subr.mxu0 0.0
    %94 = vmatpush2.msra.mxu0 0.0
    %95 = vmatprep.subr.mxu0 0.0
    %96 = vmatpush2.msra.mxu0 0.0
    %97 = vmatprep.subr.mxu0 0.0
    %98 = vmatpush2.msra.mxu0 0.0
    %99 = vmatprep.mubr.f32.mxu0 0.0
    %100 = vmatmul.mubr.f32.gmra.mxu0 %v33
    %v101 = vpop.f32.mrf.mxu0
    %v102 = vadd.f32 0.0, %v101
    %v103 = vpop.f32.mrf.mxu0
    %104 = vdwg.mxu0
    %vm105 = vcmask 195584
    %v107 = vsel %vm105, %v25, 0
    %109 = vmatprep.subr.mxu0 0.0
    %110 = vmatpush1.msra.mxu0 0.0
    %111 = vmatprep.subr.mxu0 0.0
    %112 = vmatpush1.msra.mxu0 0.0
    %113 = vmatprep.subr.mxu0 0.0
    %114 = vmatpush1.msra.mxu0 0.0
    %115 = vmatprep.subr.mxu0 0.0
    %116 = vmatpush1.msra.mxu0 0.0
    %117 = vmatprep.subr.mxu0 0.0
    %118 = vmatpush1.msra.mxu0 0.0
    %119 = vmatprep.subr.mxu0 0.0
    %120 = vmatpush1.msra.mxu0 0.0
    %121 = vmatprep.subr.mxu0 0.0
    %122 = vmatpush1.msra.mxu0 0.0
    %123 = vmatprep.subr.mxu0 0.0
    %124 = vmatpush1.msra.mxu0 0.0
    %125 = vmatprep.subr.mxu0 0.0
    %126 = vmatpush1.msra.mxu0 0.0
    %127 = vmatprep.subr.mxu0 0.0
    %128 = vmatpush1.msra.mxu0 0.0
    %129 = vmatprep.subr.mxu0 0.0
    %130 = vmatpush1.msra.mxu0 0.0
    %131 = vmatprep.subr.mxu0 0.0
    %132 = vmatpush1.msra.mxu0 0.0
    %133 = vmatprep.subr.mxu0 0.0
    %134 = vmatpush1.msra.mxu0 0.0
    %135 = vmatprep.subr.mxu0 0.0
    %136 = vmatpush1.msra.mxu0 %v28
    %137 = vmatprep.subr.mxu0 0.0
    %138 = vmatpush1.msra.mxu0 %v27
    %139 = vmatprep.subr.mxu0 0.0
    %140 = vmatpush1.msra.mxu0 %v26
    %141 = vmatprep.subr.mxu0 0.0
    %142 = vmatpush2.msra.mxu0 0.0
    %143 = vmatprep.subr.mxu0 0.0
    %144 = vmatpush2.msra.mxu0 0.0
    %145 = vmatprep.subr.mxu0 0.0
    %146 = vmatpush2.msra.mxu0 0.0
    %147 = vmatprep.subr.mxu0 0.0
    %148 = vmatpush2.msra.mxu0 0.0
    %149 = vmatprep.subr.mxu0 0.0
    %150 = vmatpush2.msra.mxu0 0.0
    %151 = vmatprep.subr.mxu0 0.0
    %152 = vmatpush2.msra.mxu0 0.0
    %153 = vmatprep.subr.mxu0 0.0
    %154 = vmatpush2.msra.mxu0 0.0
    %155 = vmatprep.subr.mxu0 0.0
    %156 = vmatpush2.msra.mxu0 0.0
    %157 = vmatprep.subr.mxu0 0.0
    %158 = vmatpush2.msra.mxu0 0.0
    %159 = vmatprep.subr.mxu0 0.0
    %160 = vmatpush2.msra.mxu0 0.0
    %161 = vmatprep.subr.mxu0 0.0
    %162 = vmatpush2.msra.mxu0 0.0
    %163 = vmatprep.subr.mxu0 0.0
    %164 = vmatpush2.msra.mxu0 0.0
    %165 = vmatprep.subr.mxu0 0.0
    %166 = vmatpush2.msra.mxu0 0.0
    %167 = vmatprep.subr.mxu0 0.0
    %168 = vmatpush2.msra.mxu0 0.0
    %169 = vmatprep.subr.mxu0 0.0
    %170 = vmatpush2.msra.mxu0 0.0
    %171 = vmatprep.subr.mxu0 0.0
    %172 = vmatpush2.msra.mxu0 0.0
    %173 = vmatprep.mubr.f32.mxu0 0.0
    %174 = vmatmul.mubr.f32.gmra.mxu0 %v107
    %v175 = vpop.f32.mrf.mxu0
    %v176 = vadd.f32 %v102, %v175
    %v177 = vpop.f32.mrf.mxu0
    %178 = vdwg.mxu0
    %v179 = vld [vmem:[%s4] sm:$0xf]
    %v180 = vlaneseq
    %v181 = vshrl.u32 %v180, 7
    %v182 = vsub.s32 0, %v181
    %v183 = vrot.slane %v179, %v182
    %v184 = vadd.f32 %v176, %v183
    %vm185 = vcmask 261120
    %v186 = vsel %vm185, %v184, 0.0
    %187 = vadd.xlane.f32.xlu0 %v186
    %v188 = vpop.xlane.xlu0 %187
    %v189 = vrcp.pop 32.0
    %v190 = vmul.f32 %v188, %v189
    %v191 = vsub.f32 %v184, %v190
    %v192 = vmul.f32 %v191, %v191
    %v193 = vsel %vm185, %v192, 0.0
    %194 = vadd.xlane.f32.xlu0 %v193
    %v195 = vpop.xlane.xlu0 %194
    %v196 = vmul.f32 %v195, %v189
    %v197 = vadd.f32 %v196, 1e-05
    %v198 = vrsqrt.pop %v197
    %v199 = vmul.f32 %v191, %v198
    %v200 = vlaneseq
    %v201 = vshrl.u32 %v200, 7
    %v202 = vsub.s32 1, %v201
    %v203 = vrot.slane %v179, %v202
    %v204 = vmul.f32 %v199, %v203
    %v205 = vlaneseq
    %v206 = vshrl.u32 %v205, 7
    %v207 = vsub.s32 2, %v206
    %v208 = vrot.slane %v179, %v207
    %v209 = vadd.f32 %v204, %v208
    %v210 = vmax.f32 %v209, 0.0
    %v211 = vlaneseq
    %v212 = vshrl.u32 %v211, 7
    %v213 = vsub.s32 3, %v212
    %v214 = vrot.slane %v179, %v213
    %v215 = vmul.f32 %v210, %v214
    %v216 = vsel %vm185, %v215, 0.0
    %217 = vadd.xlane.f32.xlu0 %v216
    %v218 = vpop.xlane.xlu0 %217
    %s219 = sld [smem:[#allocation2]]
    %v220 = vstv %s219
    %v221 = vadd.f32 %v218, %v220
    %v223 = vlaneseq
    %v224 = vand.u32 %v223, 127
    %v225 = vlaneseq
    %v226 = vshrl.u32 %v225, 7
    %v227 = vsub.s32 %v224, %v226
    %v228 = vrot.slane %v221, %v227
    %vm230 = vcmask 57344
    %231 = vst.msk [vmem:[#allocation3] sm:$0x1] %vm230, %v228
    // Predicated region
    $region26: #{critic_drr_forward.1} parent=1 // pred_check
      _
    $region27: #{critic_drr_forward.1} parent=1 // pred_check_branch
      %233 = sbr.rel (0) target = $region29
    $region28: #{critic_drr_forward.1} parent=1 // pred_region
      %s235 = ssub.s32 16, 16
      %236 = vsyncadd [#allocation4], %s235
      %s238 = sshll.u32 [#allocation3], 4
      %s239 = int_to_ptr.vmem [resolvable:$true] %s238
      %241 = dma.vmem_to_hbm [thread:$0]  %s239, 16, %s6, [#allocation4]
    $region29: #{critic_drr_forward.1} parent=1 // pred_fallthru
      _
    // Predicated region
    $region30: #{critic_drr_forward.1} parent=1 // pred_check
      _
    $region31: #{critic_drr_forward.1} parent=1 // pred_check_branch
      %243 = sbr.rel (0) target = $region33
    $region32: #{critic_drr_forward.1} parent=1 // pred_region
      %244 = dma.done [#allocation4], 16
    $region33: #{critic_drr_forward.1} parent=1 // pred_fallthru
      _
    %245 = vsyncpa [#allocation4], 1

</llo_original>
